<compile_context>
chip_gen: v6e
topology: v6e:2x2x1
jax: 0.10.0
libtpu: 0.0.40
codegen_flags: <defaults>
</compile_context>

<pallas_src>
import functools

import jax
import jax.numpy as jnp
from jax import lax
from jax.experimental import pallas as pl
from jax.experimental.pallas import tpu as pltpu


# ----------------------------- Pallas kernel ------------------------------
def _pre_kernel(ue_ref, ie_ref, wi_ref, alpha_ref, out_ref):
    # ue_ref, ie_ref   : (block_b, D)  gathered embedding rows (batch on sublanes)
    # wi_ref, alpha_ref: (1, block_b)  lane-dense rows (batch on lanes)
    # out_ref          : (1, block_b)  lane-dense output row
    ue = ue_ref[...].astype(jnp.float32)
    ie = ie_ref[...].astype(jnp.float32)
    prod = ue * ie                                   # VPU elementwise

    # Reduce over D and move the batch onto lanes in a single MXU op:
    #   ones(8, D) contracted with prod(block_b, D) on D  ->  (8, block_b)
    # (all 8 rows identical; MXU is otherwise idle in this HBM-bound loop).
    ones = jnp.ones((8, prod.shape[1]), dtype=jnp.float32)
    emb = lax.dot_general(
        ones, prod,
        dimension_numbers=(((1,), (1,)), ((), ())),
        preferred_element_type=jnp.float32,
    )                                                # (8, block_b)

    out_ref[...] = wi_ref[...] * alpha_ref[...] + emb[0:1, :]


def p_re_pallas(ue, ie, wi, alpha, *, block_b):
    """ue, ie: (B_pad, D); wi, alpha: (1, B_pad) f32  ->  (1, B_pad) f32."""
    Bp, D = ue.shape
    assert Bp % block_b == 0
    n_blocks = Bp // block_b

    vec_spec = pl.BlockSpec((block_b, D), lambda b: (b, 0))
    row_spec = pl.BlockSpec((1, block_b), lambda b: (0, b))

    # Advisory cost model: streaming read of both embedding slabs + w + alpha,
    # one output row, 2*D flops per batch element, no transcendentals.
    bytes_accessed = Bp * D * (ue.dtype.itemsize + ie.dtype.itemsize) + 3 * Bp * 4
    flops = 2 * D * Bp + 2 * Bp

    return pl.pallas_call(
        _pre_kernel,
        out_shape=jax.ShapeDtypeStruct((1, Bp), jnp.float32),
        grid_spec=pltpu.PrefetchScalarGridSpec(
            num_scalar_prefetch=0,
            grid=(n_blocks,),
            in_specs=[vec_spec, vec_spec, row_spec, row_spec],
            out_specs=row_spec,
        ),
        compiler_params=pltpu.CompilerParams(
            dimension_semantics=("parallel",),
            # (block_b, 32) blocks are lane-padded to 128 in VMEM; at
            # block_b=8192 the double-buffered footprint is ~18 MiB, so raise
            # v5e's 16 MiB default (32 MiB is <= physical VMEM on all gens).
            vmem_limit_bytes=32 * 1024 * 1024,
        ),
        cost_estimate=pl.CostEstimate(
            flops=flops, transcendentals=0, bytes_accessed=bytes_accessed
        ),
    )(ue, ie, wi, alpha)


# ------------------------- tiling helpers ---------------------------------
def _cdiv(a, b):
    return -(-a // b)


def _round_up(x, m):
    return _cdiv(x, m) * m


def _choose_tiles(batch, block_b_max):
    """Pick (block_b, n_blocks): lane tiles are multiples of 128, capped at
    block_b_max; large batches keep an even number (>=2) of grid steps so
    dimension_semantics=("parallel",) balances v7x's two TensorCores."""
    assert block_b_max >= 128 and block_b_max % 128 == 0
    b_lanes = _round_up(batch, 128)
    n_blocks = _cdiv(b_lanes, block_b_max)
    if n_blocks == 1 and b_lanes > 4096:
        n_blocks = 2
    if n_blocks > 1 and n_blocks % 2 == 1:
        n_blocks += 1
    block_b = _round_up(_cdiv(b_lanes, n_blocks), 128)
    return block_b, n_blocks


# ------------------------- module parameters / forward --------------------
def init_params(key, n_users, n_items, emb_dim=32):
    k_u, k_i, k_w = jax.random.split(key, 3)
    user_emb = jax.random.normal(k_u, (n_users, emb_dim), dtype=jnp.float32)
    item_emb = jax.random.normal(k_i, (n_items, emb_dim), dtype=jnp.float32)
    # nn.Embedding(padding_idx=0): row 0 is zero-initialized.
    user_emb = user_emb.at[0].set(0.0)
    item_emb = item_emb.at[0].set(0.0)
    w = jax.random.normal(k_w, (n_items,), dtype=jnp.float32)
    return {"user_emb": user_emb, "item_emb": item_emb, "w": w}


@functools.partial(jax.jit, static_argnames=("block_b_max",))
def p_re_forward(params, u, i, alpha, *, block_b_max=8192):
    """u, i: (B,) int32 indices;  alpha: (B,) f32  ->  (B,) f32."""
    B = u.shape[0]
    block_b, n_blocks = _choose_tiles(B, block_b_max)
    B_pad = block_b * n_blocks
    pad = B_pad - B

    # Padding: indices padded with 0 (a valid row -> finite values), alpha
    # padded with 0.0.  Padded lanes are discarded by the final [:B] slice,
    # so their values never affect the returned result.
    # Note: jnp.take under jit clips out-of-range indices silently (PyTorch
    # nn.Embedding would raise) -- callers must pass in-range indices.
    u_p = jnp.pad(u, (0, pad))
    i_p = jnp.pad(i, (0, pad))
    a_p = jnp.pad(alpha.astype(jnp.float32), (0, pad))[None, :]            # (1, B_pad)

    # Gathers stay in XLA (data-dependent row lookups); no extra transpose /
    # stack passes afterwards -- the kernel consumes the natural layouts.
    ue = jnp.take(params["user_emb"], u_p, axis=0)                          # (B_pad, D)
    ie = jnp.take(params["item_emb"], i_p, axis=0)                          # (B_pad, D)
    wi = jnp.take(params["w"], i_p, axis=0).astype(jnp.float32)[None, :]    # (1, B_pad)

    out = p_re_pallas(ue, ie, wi, a_p, block_b=block_b)                     # (1, B_pad)
    return out[0, :B]


def p_re_reference(params, u, i, alpha):
    w_mul = alpha * params["w"][i]
    u_e = params["user_emb"][u]
    i_e = params["item_emb"][i]
    emb_sim = jnp.sum(u_e * i_e, axis=-1)
    return w_mul + emb_sim


# --------------------------------- main ------------------------------------
if __name__ == "__main__":
    n_users, n_items, emb_dim = 20, 30, 32

    key = jax.random.PRNGKey(0)
    k_params, k_u, k_i, k_a = jax.random.split(key, 4)
    params = init_params(k_params, n_users, n_items, emb_dim)

    # 1) Small batch: single-tile path.
    batch = 16
    u = jax.random.randint(k_u, (batch,), 0, n_users, dtype=jnp.int32)
    i = jax.random.randint(k_i, (batch,), 0, n_items, dtype=jnp.int32)
    alpha = jax.random.uniform(k_a, (batch,), dtype=jnp.float32)

    out = jax.block_until_ready(p_re_forward(params, u, i, alpha))
    ref = p_re_reference(params, u, i, alpha)
    assert out.shape == (batch,)
    assert jnp.allclose(out, ref, atol=1e-5, rtol=1e-5), (out, ref)

    # 2) Larger batch with a small block cap: exercises the multi-block
    #    (even >=2 grid steps, padded tail) path.
    batch2 = 600
    u2 = jax.random.randint(k_u, (batch2,), 0, n_users, dtype=jnp.int32)
    i2 = jax.random.randint(k_i, (batch2,), 0, n_items, dtype=jnp.int32)
    alpha2 = jax.random.uniform(k_a, (batch2,), dtype=jnp.float32)

    out2 = jax.block_until_ready(p_re_forward(params, u2, i2, alpha2, block_b_max=256))
    ref2 = p_re_reference(params, u2, i2, alpha2)
    assert out2.shape == (batch2,)
    assert jnp.allclose(out2, ref2, atol=1e-5, rtol=1e-5), (out2, ref2)

    print("KERNEL_OK")
</pallas_src>

<mosaic_0001>
module attributes {stable_mosaic.version = 11 : i64} {
  func.func @_pre_kernel(%arg0: i32, %arg1: memref<128x32xf32, #tpu.memory_space<vmem>>, %arg2: memref<128x32xf32, #tpu.memory_space<vmem>>, %arg3: memref<1x128xf32, #tpu.memory_space<vmem>>, %arg4: memref<1x128xf32, #tpu.memory_space<vmem>>, %arg5: memref<1x128xf32, #tpu.memory_space<vmem>>) attributes {dimension_semantics = [#tpu.dimension_semantics<parallel>], iteration_bounds = array<i64: 1>, scalar_prefetch = 0 : i64, scratch_operands = 0 : i64, tpu.core_type = #tpu.core_type<tc>, window_params = [{transform_indices = @transform_0, window_bounds = array<i64: 128, 32>}, {transform_indices = @transform_1, window_bounds = array<i64: 128, 32>}, {transform_indices = @transform_2, window_bounds = array<i64: 1, 128>}, {transform_indices = @transform_3, window_bounds = array<i64: 1, 128>}, {transform_indices = @transform_4, window_bounds = array<i64: 1, 128>}]} {
    %c0 = arith.constant 0 : index
    %c0_0 = arith.constant 0 : index
    %0 = vector.load %arg1[%c0, %c0_0] : memref<128x32xf32, #tpu.memory_space<vmem>>, vector<128x32xf32>
    %c0_1 = arith.constant 0 : index
    %c0_2 = arith.constant 0 : index
    %1 = vector.load %arg2[%c0_1, %c0_2] : memref<128x32xf32, #tpu.memory_space<vmem>>, vector<128x32xf32>
    %2 = arith.mulf %0, %1 : vector<128x32xf32>
    %cst = arith.constant 1.000000e+00 : f32
    %3 = vector.broadcast %cst : f32 to vector<8x32xf32>
    %cst_3 = arith.constant dense<0.000000e+00> : vector<8x128xf32>
    %4 = tpu.matmul %3, %2, %cst_3 {dimension_numbers = #tpu.dot_dimension_numbers<[1], [1], [0], [0], [0, 0, 1, 0], [], []>} : vector<8x32xf32>, vector<128x32xf32>, vector<8x128xf32> -> vector<8x128xf32>
    %c0_4 = arith.constant 0 : index
    %c0_5 = arith.constant 0 : index
    %5 = vector.load %arg3[%c0_4, %c0_5] : memref<1x128xf32, #tpu.memory_space<vmem>>, vector<1x128xf32>
    %c0_6 = arith.constant 0 : index
    %c0_7 = arith.constant 0 : index
    %6 = vector.load %arg4[%c0_6, %c0_7] : memref<1x128xf32, #tpu.memory_space<vmem>>, vector<1x128xf32>
    %7 = arith.mulf %5, %6 : vector<1x128xf32>
    %8 = vector.extract_strided_slice %4 {offsets = [0, 0], sizes = [1, 128], strides = [1, 1]} : vector<8x128xf32> to vector<1x128xf32>
    %9 = arith.addf %7, %8 : vector<1x128xf32>
    %c0_8 = arith.constant 0 : index
    %c0_9 = arith.constant 0 : index
    %10 = vector.load %arg5[%c0_8, %c0_9] : memref<1x128xf32, #tpu.memory_space<vmem>>, vector<1x128xf32>
    tpu.vector_store %arg5[%c0_8, %c0_9], %9 {strides = array<i32>} : memref<1x128xf32, #tpu.memory_space<vmem>>, vector<1x128xf32>,
    return
  }
  func.func @transform_0(%arg0: i32) -> (i32, i32) {
    %c0_i32 = arith.constant 0 : i32
    %c0_i32_0 = arith.constant 0 : i32
    return %arg0, %c0_i32 : i32, i32
  }
  func.func @transform_1(%arg0: i32) -> (i32, i32) {
    %c0_i32 = arith.constant 0 : i32
    %c0_i32_0 = arith.constant 0 : i32
    return %arg0, %c0_i32 : i32, i32
  }
  func.func @transform_2(%arg0: i32) -> (i32, i32) {
    %c0_i32 = arith.constant 0 : i32
    %c0_i32_0 = arith.constant 0 : i32
    return %c0_i32, %arg0 : i32, i32
  }
  func.func @transform_3(%arg0: i32) -> (i32, i32) {
    %c0_i32 = arith.constant 0 : i32
    %c0_i32_0 = arith.constant 0 : i32
    return %c0_i32, %arg0 : i32, i32
  }
  func.func @transform_4(%arg0: i32) -> (i32, i32) {
    %c0_i32 = arith.constant 0 : i32
    %c0_i32_0 = arith.constant 0 : i32
    return %c0_i32, %arg0 : i32, i32
  }
}

</mosaic_0001>

<llo_original>
// kernel: p_re_forward.1
$region0: #{p_re_forward.1}
  #allocation0 [shape = 'u32[]', space=smem, size = 0x4, offset = 0x4, fixed_abs, tag = 'smem constant byte address 0x4 - core index']
  #allocation1 [shape = 'u32[144,128]{1,0:T(1,128)}', space=vmem, size = 0x12000, scoped, tag = 'internal scratch']
  %s0 = inlined_call_operand.vmem [shape: f32[128,32], index: 0, kind: input, shape index: {}]
  %s1 = inlined_call_operand.vmem [shape: f32[128,32], index: 1, kind: input, shape index: {}]
  %s2 = inlined_call_operand.vmem [shape: f32[1,128], index: 2, kind: input, shape index: {}]
  %s3 = inlined_call_operand.vmem [shape: f32[1,128], index: 3, kind: input, shape index: {}]
  %s4 = inlined_call_operand.vmem [shape: f32[1,128], index: 4, kind: output, shape index: {}]
  %s5 = sld [smem:[#allocation0]]
  $region26: #{p_re_forward.1} parent=0
    _
  %s7 = ssub.s32 1, %s5
  %s8 = scalar_select 0, %s7, %s5
  // Predicated region
  $region2: #{p_re_forward.1} parent=0 // pred_check
    _
  $region3: #{p_re_forward.1} parent=0 // pred_check_branch
    %10 = sbr.rel (0) target = $region5
  $region4: #{p_re_forward.1} parent=0 // pred_region
    _
  $region5: #{p_re_forward.1} parent=0 // pred_fallthru
    _
  // Predicated region
  $region6: #{p_re_forward.1} parent=0 // pred_check
    _
  $region7: #{p_re_forward.1} parent=0 // pred_check_branch
    %12 = sbr.rel (0) target = $region9
  $region8: #{p_re_forward.1} parent=0 // pred_region
    _
  $region9: #{p_re_forward.1} parent=0 // pred_fallthru
    _
  // Predicated region
  $region10: #{p_re_forward.1} parent=0 // pred_check
    _
  $region11: #{p_re_forward.1} parent=0 // pred_check_branch
    %14 = sbr.rel (0) target = $region13
  $region12: #{p_re_forward.1} parent=0 // pred_region
    _
  $region13: #{p_re_forward.1} parent=0 // pred_fallthru
    _
  // Predicated region
  $region14: #{p_re_forward.1} parent=0 // pred_check
    _
  $region15: #{p_re_forward.1} parent=0 // pred_check_branch
    %16 = sbr.rel (0) target = $region17
  $region16: #{p_re_forward.1} parent=0 // pred_region
    _
  $region17: #{p_re_forward.1} parent=0 // pred_fallthru
    _
  %v17 = vld [vmem:[%s0] sm:$0xff]
  %v18 = vld [vmem:[%s0 + $0x8] sm:$0xff]
  %v19 = vld [vmem:[%s0 + $0x10] sm:$0xff]
  %v20 = vld [vmem:[%s0 + $0x18] sm:$0xff]
  %v21 = vld [vmem:[%s0 + $0x20] sm:$0xff]
  %v22 = vld [vmem:[%s0 + $0x28] sm:$0xff]
  %v23 = vld [vmem:[%s0 + $0x30] sm:$0xff]
  %v24 = vld [vmem:[%s0 + $0x38] sm:$0xff]
  %v25 = vld [vmem:[%s0 + $0x40] sm:$0xff]
  %v26 = vld [vmem:[%s0 + $0x48] sm:$0xff]
  %v27 = vld [vmem:[%s0 + $0x50] sm:$0xff]
  %v28 = vld [vmem:[%s0 + $0x58] sm:$0xff]
  %v29 = vld [vmem:[%s0 + $0x60] sm:$0xff]
  %v30 = vld [vmem:[%s0 + $0x68] sm:$0xff]
  %v31 = vld [vmem:[%s0 + $0x70] sm:$0xff]
  %v32 = vld [vmem:[%s0 + $0x78] sm:$0xff]
  %v33 = vld [vmem:[%s1] sm:$0xff]
  %v34 = vld [vmem:[%s1 + $0x8] sm:$0xff]
  %v35 = vld [vmem:[%s1 + $0x10] sm:$0xff]
  %v36 = vld [vmem:[%s1 + $0x18] sm:$0xff]
  %v37 = vld [vmem:[%s1 + $0x20] sm:$0xff]
  %v38 = vld [vmem:[%s1 + $0x28] sm:$0xff]
  %v39 = vld [vmem:[%s1 + $0x30] sm:$0xff]
  %v40 = vld [vmem:[%s1 + $0x38] sm:$0xff]
  %v41 = vld [vmem:[%s1 + $0x40] sm:$0xff]
  %v42 = vld [vmem:[%s1 + $0x48] sm:$0xff]
  %v43 = vld [vmem:[%s1 + $0x50] sm:$0xff]
  %v44 = vld [vmem:[%s1 + $0x58] sm:$0xff]
  %v45 = vld [vmem:[%s1 + $0x60] sm:$0xff]
  %v46 = vld [vmem:[%s1 + $0x68] sm:$0xff]
  %v47 = vld [vmem:[%s1 + $0x70] sm:$0xff]
  %v48 = vld [vmem:[%s1 + $0x78] sm:$0xff]
  %v49 = vmul.f32 %v17, %v33
  %v50 = vmul.f32 %v18, %v34
  %v51 = vmul.f32 %v19, %v35
  %v52 = vmul.f32 %v20, %v36
  %v53 = vmul.f32 %v21, %v37
  %v54 = vmul.f32 %v22, %v38
  %v55 = vmul.f32 %v23, %v39
  %v56 = vmul.f32 %v24, %v40
  %v57 = vmul.f32 %v25, %v41
  %v58 = vmul.f32 %v26, %v42
  %v59 = vmul.f32 %v27, %v43
  %v60 = vmul.f32 %v28, %v44
  %v61 = vmul.f32 %v29, %v45
  %v62 = vmul.f32 %v30, %v46
  %v63 = vmul.f32 %v31, %v47
  %v64 = vmul.f32 %v32, %v48
  %vm65 = vcmask 261120
  %v67 = vsel %vm65, 1.0, 0
  %v70 = vsel %vm65, %v49, 0
  %v73 = vsel %vm65, %v50, 0
  %v76 = vsel %vm65, %v51, 0
  %v79 = vsel %vm65, %v52, 0
  %v82 = vsel %vm65, %v53, 0
  %v85 = vsel %vm65, %v54, 0
  %v88 = vsel %vm65, %v55, 0
  %v91 = vsel %vm65, %v56, 0
  %v94 = vsel %vm65, %v57, 0
  %v97 = vsel %vm65, %v58, 0
  %v100 = vsel %vm65, %v59, 0
  %v103 = vsel %vm65, %v60, 0
  %v106 = vsel %vm65, %v61, 0
  %v109 = vsel %vm65, %v62, 0
  %v112 = vsel %vm65, %v63, 0
  %v115 = vsel %vm65, %v64, 0
  %117 = vmatprep.subr.mxu0 0.0
  %118 = vmatpush1.xpose.msra.mxu0 %v115
  %119 = vmatprep.subr.mxu0 0.0
  %120 = vmatpush1.xpose.msra.mxu0 %v112
  %121 = vmatprep.subr.mxu0 0.0
  %122 = vmatpush1.xpose.msra.mxu0 %v109
  %123 = vmatprep.subr.mxu0 0.0
  %124 = vmatpush1.xpose.msra.mxu0 %v106
  %125 = vmatprep.subr.mxu0 0.0
  %126 = vmatpush1.xpose.msra.mxu0 %v103
  %127 = vmatprep.subr.mxu0 0.0
  %128 = vmatpush1.xpose.msra.mxu0 %v100
  %129 = vmatprep.subr.mxu0 0.0
  %130 = vmatpush1.xpose.msra.mxu0 %v97
  %131 = vmatprep.subr.mxu0 0.0
  %132 = vmatpush1.xpose.msra.mxu0 %v94
  %133 = vmatprep.subr.mxu0 0.0
  %134 = vmatpush1.xpose.msra.mxu0 %v91
  %135 = vmatprep.subr.mxu0 0.0
  %136 = vmatpush1.xpose.msra.mxu0 %v88
  %137 = vmatprep.subr.mxu0 0.0
  %138 = vmatpush1.xpose.msra.mxu0 %v85
  %139 = vmatprep.subr.mxu0 0.0
  %140 = vmatpush1.xpose.msra.mxu0 %v82
  %141 = vmatprep.subr.mxu0 0.0
  %142 = vmatpush1.xpose.msra.mxu0 %v79
  %143 = vmatprep.subr.mxu0 0.0
  %144 = vmatpush1.xpose.msra.mxu0 %v76
  %145 = vmatprep.subr.mxu0 0.0
  %146 = vmatpush1.xpose.msra.mxu0 %v73
  %147 = vmatprep.subr.mxu0 0.0
  %148 = vmatpush1.xpose.msra.mxu0 %v70
  %149 = vmatprep.subr.mxu0 0.0
  %150 = vmatpush2.xpose.msra.mxu0 0.0
  %151 = vmatprep.subr.mxu0 0.0
  %152 = vmatpush2.xpose.msra.mxu0 0.0
  %153 = vmatprep.subr.mxu0 0.0
  %154 = vmatpush2.xpose.msra.mxu0 0.0
  %155 = vmatprep.subr.mxu0 0.0
  %156 = vmatpush2.xpose.msra.mxu0 0.0
  %157 = vmatprep.subr.mxu0 0.0
  %158 = vmatpush2.xpose.msra.mxu0 0.0
  %159 = vmatprep.subr.mxu0 0.0
  %160 = vmatpush2.xpose.msra.mxu0 0.0
  %161 = vmatprep.subr.mxu0 0.0
  %162 = vmatpush2.xpose.msra.mxu0 0.0
  %163 = vmatprep.subr.mxu0 0.0
  %164 = vmatpush2.xpose.msra.mxu0 0.0
  %165 = vmatprep.subr.mxu0 0.0
  %166 = vmatpush2.xpose.msra.mxu0 0.0
  %167 = vmatprep.subr.mxu0 0.0
  %168 = vmatpush2.xpose.msra.mxu0 0.0
  %169 = vmatprep.subr.mxu0 0.0
  %170 = vmatpush2.xpose.msra.mxu0 0.0
  %171 = vmatprep.subr.mxu0 0.0
  %172 = vmatpush2.xpose.msra.mxu0 0.0
  %173 = vmatprep.subr.mxu0 0.0
  %174 = vmatpush2.xpose.msra.mxu0 0.0
  %175 = vmatprep.subr.mxu0 0.0
  %176 = vmatpush2.xpose.msra.mxu0 0.0
  %177 = vmatprep.subr.mxu0 0.0
  %178 = vmatpush2.xpose.msra.mxu0 0.0
  %179 = vmatprep.subr.mxu0 0.0
  %180 = vmatpush2.xpose.msra.mxu0 0.0
  %181 = vmatprep.mubr.f32.mxu0 0.0
  %182 = vmatmul.mubr.f32.gmra.mxu0 %v67
  %v183 = vpop.f32.mrf.mxu0
  %v184 = vadd.f32 0.0, %v183
  %v185 = vpop.f32.mrf.mxu0
  %186 = vdwg.mxu0
  %v187 = vld [vmem:[%s2] sm:$0x1]
  %v188 = vld [vmem:[%s3] sm:$0x1]
  %v189 = vmul.f32 %v187, %v188
  %v190 = vadd.f32 %v189, %v184
  %191 = vst [vmem:[%s4] sm:$0x1] %v190
  // Predicated region
  $region18: #{p_re_forward.1} parent=0 // pred_check
    _
  $region19: #{p_re_forward.1} parent=0 // pred_check_branch
    %193 = sbr.rel (0) target = $region21
  $region20: #{p_re_forward.1} parent=0 // pred_region
    _
  $region21: #{p_re_forward.1} parent=0 // pred_fallthru
    _
  // Predicated region
  $region22: #{p_re_forward.1} parent=0 // pred_check
    _
  $region23: #{p_re_forward.1} parent=0 // pred_check_branch
    %195 = sbr.rel (0) target = $region25
  $region24: #{p_re_forward.1} parent=0 // pred_region
    _
  $region25: #{p_re_forward.1} parent=0 // pred_fallthru
    _

</llo_original>
